<compile_context>
chip_gen: v6e
topology: v6e:2x2x1
jax: 0.10.0
libtpu: 0.0.40
codegen_flags: <defaults>
</compile_context>

<pallas_src>
import functools
import math

import jax
import jax.numpy as jnp
from jax.experimental import pallas as pl
from jax.experimental.pallas import tpu as pltpu

LOG_STD_MAX = 2.0
LOG_STD_MIN = -5.0
HIDDEN = 256
_HALF_LOG_2PI = 0.5 * math.log(2.0 * math.pi)


def _round_up(n, m):
    return ((n + m - 1) // m) * m


def _solo_bc_kernel(x_ref, w1_ref, b1_ref, w2_ref, b2_ref, w3_ref, b3_ref,
                    eps_ref, out_ref, *, act_dim, out_pad):
    # In-kernel bf16 cast of the activations (weights already stored bf16).
    x = x_ref[...].astype(jnp.bfloat16)                       # (TB, S)

    h1 = jnp.dot(x, w1_ref[...], preferred_element_type=jnp.float32)
    h1 = jnp.maximum(h1 + b1_ref[...], 0.0)
    h2 = jnp.dot(h1.astype(jnp.bfloat16), w2_ref[...],
                 preferred_element_type=jnp.float32)
    h2 = jnp.maximum(h2 + b2_ref[...], 0.0)

    # One merged final-layer matmul (fills the 256-wide MXU on v6e/v7x).
    y = jnp.dot(h2.astype(jnp.bfloat16), w3_ref[...],
                preferred_element_type=jnp.float32) + b3_ref[...]
    y_mu = y[:, :out_pad]           # mu placed at lanes [0:ad] and [ad:2ad]
    y_ls = y[:, out_pad:]           # raw log_std at lanes [ad:2ad] and [2ad:3ad]

    lane = jax.lax.broadcasted_iota(jnp.int32, y_mu.shape, 1)

    mode = jnp.tanh(y_mu)
    ls = jnp.tanh(y_ls)
    log_std = LOG_STD_MIN + 0.5 * (LOG_STD_MAX - LOG_STD_MIN) * (ls + 1.0)
    std = jnp.exp(log_std)

    # eps tiled host-side as [eps|eps|eps] over lanes [0:3*ad]; zero-fill the
    # (stale) lanes beyond that so everything stays finite/deterministic.
    eps = jnp.where(lane < 3 * act_dim, eps_ref[...], 0.0)

    # dist.rsample(): samples = mu + std * eps  (valid at lanes [ad:2ad]).
    samples = y_mu + std * eps
    # Normal(mu, std).log_prob(samples): z = (samples - mu)/std == eps exactly.
    logp = -0.5 * (eps * eps) - log_std - _HALF_LOG_2PI      # valid at [2ad:3ad]

    # Pack [mode | samples | log_probs | 0...] into one lane-dense slab and do
    # a single unmasked store.
    packed = jnp.where(lane < act_dim, mode,
             jnp.where(lane < 2 * act_dim, samples,
             jnp.where(lane < 3 * act_dim, logp, 0.0)))
    out_ref[...] = packed


def solo_bc_forward(states, kparams, eps, act_dim):
    """Returns (mode, samples, log_probs) exactly like Solo_BC.forward
    (log_probs is the per-element (B, act_dim) Normal log-prob, as in PyTorch)."""
    w1, b1, w2, b2, w3, b3 = kparams
    B, state_dim = states.shape
    hidden = w1.shape[1]
    out_pad = w3.shape[1] // 2

    # Batch tiling: full batch as one block when tiny; otherwise at least two
    # grid steps (so both v7x TensorCores get work), capped at 512 rows/step.
    if B <= 8:
        TB = B
    else:
        TB = min(512, _round_up(-(-B // 2), 8))
    grid = (pl.cdiv(B, TB),)

    # Tiny host-side eps prep: (B, 3*act_dim) = [eps | eps | eps] so the values
    # already sit at the lanes where samples ([ad:2ad]) and logp ([2ad:3ad])
    # need them -- no 128-lane padded eps array, no in-kernel lane shifts.
    eps3 = jnp.concatenate([eps, eps, eps], axis=-1).astype(jnp.float32)

    batch_map = lambda i: (i, 0)
    const_map = lambda i: (0, 0)

    out = pl.pallas_call(
        functools.partial(_solo_bc_kernel, act_dim=act_dim, out_pad=out_pad),
        grid=grid,
        in_specs=[
            pl.BlockSpec((TB, state_dim), batch_map),
            pl.BlockSpec((state_dim, hidden), const_map),
            pl.BlockSpec((1, hidden), const_map),
            pl.BlockSpec((hidden, hidden), const_map),
            pl.BlockSpec((1, hidden), const_map),
            pl.BlockSpec((hidden, 2 * out_pad), const_map),
            pl.BlockSpec((1, 2 * out_pad), const_map),
            # Block is lane-wider than the (B, 3*act_dim) eps array; Pallas
            # clamps the copy and the kernel zero-fills the extra lanes.
            pl.BlockSpec((TB, out_pad), batch_map),
        ],
        out_specs=pl.BlockSpec((TB, out_pad), batch_map),
        out_shape=jax.ShapeDtypeStruct((B, out_pad), jnp.float32),
        compiler_params=pltpu.CompilerParams(
            dimension_semantics=("parallel",)),
    )(states, w1, b1, w2, b2, w3, b3, eps3)

    mode = out[:, 0 * act_dim:1 * act_dim]
    samples = out[:, 1 * act_dim:2 * act_dim]
    log_probs = out[:, 2 * act_dim:3 * act_dim]
    return mode, samples, log_probs


def init_params(key, state_dim, act_dim):
    """Deterministic init matching PyTorch nn.Linear default:
    U(-1/sqrt(fan_in), 1/sqrt(fan_in)) for both weight and bias.
    Weights stored as (in_features, out_features), biases as (1, out)."""
    ks = jax.random.split(key, 6)

    def linear(kw, kb, fan_in, fan_out):
        bound = 1.0 / math.sqrt(fan_in)
        w = jax.random.uniform(kw, (fan_in, fan_out), jnp.float32, -bound, bound)
        b = jax.random.uniform(kb, (1, fan_out), jnp.float32, -bound, bound)
        return w, b

    w1, b1 = linear(ks[0], ks[1], state_dim, HIDDEN)
    w2, b2 = linear(ks[2], ks[3], HIDDEN, HIDDEN)
    w3, b3 = linear(ks[4], ks[5], HIDDEN, 2 * act_dim)
    return (w1, b1, w2, b2, w3, b3)


def prepare_params(params, act_dim):
    """Host-side, one-time prep.

    The final layer is rebuilt as a single merged (HIDDEN, 2*OUT_PAD) matrix:
      cols [0 : OUT_PAD)          -> mu head at lanes [0:ad] and [ad:2ad]
      cols [OUT_PAD : 2*OUT_PAD)  -> log_std head at lanes [ad:2ad] and [2ad:3ad]
    so the kernel can build the packed [mode|samples|logp] slab without any
    lane shifts. Weights are cast to bf16 (MXU operands); biases stay f32."""
    w1, b1, w2, b2, w3, b3 = params
    hidden = w1.shape[1]
    out_pad = _round_up(max(3 * act_dim, 1), 128)
    ad = act_dim

    w_mu, w_ls = w3[:, :ad], w3[:, ad:2 * ad]
    b_mu, b_ls = b3[:, :ad], b3[:, ad:2 * ad]

    w3a = jnp.zeros((hidden, out_pad), jnp.float32)
    w3a = w3a.at[:, 0:ad].set(w_mu).at[:, ad:2 * ad].set(w_mu)
    b3a = jnp.zeros((1, out_pad), jnp.float32)
    b3a = b3a.at[:, 0:ad].set(b_mu).at[:, ad:2 * ad].set(b_mu)

    w3b = jnp.zeros((hidden, out_pad), jnp.float32)
    w3b = w3b.at[:, ad:2 * ad].set(w_ls).at[:, 2 * ad:3 * ad].set(w_ls)
    b3b = jnp.zeros((1, out_pad), jnp.float32)
    b3b = b3b.at[:, ad:2 * ad].set(b_ls).at[:, 2 * ad:3 * ad].set(b_ls)

    w3p = jnp.concatenate([w3a, w3b], axis=1)   # (hidden, 2*out_pad)
    b3p = jnp.concatenate([b3a, b3b], axis=1)   # (1, 2*out_pad)

    bf = lambda a: a.astype(jnp.bfloat16)
    return (bf(w1), b1, bf(w2), b2, bf(w3p), b3p)


def _reference_bf16(states, params, eps):
    """Pure-JAX reference following the kernel's numerical path
    (bf16 MXU operands, f32 accumulation, z == eps)."""
    w1, b1, w2, b2, w3, b3 = params
    ad = eps.shape[1]
    xb = states.astype(jnp.bfloat16)
    h1 = jnp.maximum(jnp.dot(xb, w1.astype(jnp.bfloat16),
                             preferred_element_type=jnp.float32) + b1, 0.0)
    h2 = jnp.maximum(jnp.dot(h1.astype(jnp.bfloat16), w2.astype(jnp.bfloat16),
                             preferred_element_type=jnp.float32) + b2, 0.0)
    y = jnp.dot(h2.astype(jnp.bfloat16), w3.astype(jnp.bfloat16),
                preferred_element_type=jnp.float32) + b3
    mu, ls = y[:, :ad], y[:, ad:]
    mode = jnp.tanh(mu)
    log_std = LOG_STD_MIN + 0.5 * (LOG_STD_MAX - LOG_STD_MIN) * (jnp.tanh(ls) + 1.0)
    std = jnp.exp(log_std)
    samples = mu + std * eps
    logp = -0.5 * (eps * eps) - log_std - _HALF_LOG_2PI
    return mode, samples, logp


def _reference_f32(states, params, eps):
    """Pure-f32 reference mirroring the PyTorch forward literally
    (including the divide in log_prob) — used as a loose semantic check."""
    w1, b1, w2, b2, w3, b3 = params
    ad = eps.shape[1]
    h1 = jnp.maximum(states @ w1 + b1, 0.0)
    h2 = jnp.maximum(h1 @ w2 + b2, 0.0)
    out = h2 @ w3 + b3
    mu, log_std = out[:, :ad], out[:, ad:]
    mode = jnp.tanh(mu)
    log_std = jnp.tanh(log_std)
    log_std = LOG_STD_MIN + 0.5 * (LOG_STD_MAX - LOG_STD_MIN) * (log_std + 1.0)
    std = jnp.exp(log_std)
    samples = mu + std * eps
    z = (samples - mu) / std
    logp = -0.5 * z * z - log_std - _HALF_LOG_2PI
    return mode, samples, logp


def _check(states, params, kparams, eps, act_dim):
    mode, samples, log_probs = solo_bc_forward(states, kparams, eps, act_dim)
    jax.block_until_ready((mode, samples, log_probs))

    # Same-numeric-path check (bf16 MXU operands, f32 elementwise).
    r_mode, r_samples, r_logp = _reference_bf16(states, params, eps)
    assert jnp.allclose(mode, r_mode, atol=2e-4, rtol=2e-4)
    assert jnp.allclose(samples, r_samples, atol=2e-4, rtol=2e-4)
    assert jnp.allclose(log_probs, r_logp, atol=2e-4, rtol=2e-4)

    # Loose semantic check vs the full-f32 PyTorch-equivalent math.
    f_mode, f_samples, f_logp = _reference_f32(states, params, eps)
    assert jnp.allclose(mode, f_mode, atol=5e-2, rtol=5e-2)
    assert jnp.allclose(samples, f_samples, atol=5e-2, rtol=5e-2)
    assert jnp.allclose(log_probs, f_logp, atol=5e-2, rtol=5e-2)


if __name__ == "__main__":
    key = jax.random.PRNGKey(0)
    k_param, k_state, k_eps, k_state2, k_eps2 = jax.random.split(key, 5)

    batch, state_dim, act_dim = 2, 16, 4

    params = init_params(k_param, state_dim, act_dim)
    kparams = prepare_params(params, act_dim)

    # Reparameterization noise for dist.rsample(); deterministic from PRNGKey(0).
    states = jax.random.normal(k_state, (batch, state_dim), jnp.float32)
    eps = jax.random.normal(k_eps, (batch, act_dim), jnp.float32)
    _check(states, params, kparams, eps, act_dim)

    # Also exercise the multi-step batch grid (2 blocks, partial last block).
    states2 = jax.random.normal(k_state2, (24, state_dim), jnp.float32)
    eps2 = jax.random.normal(k_eps2, (24, act_dim), jnp.float32)
    _check(states2, params, kparams, eps2, act_dim)

    print("KERNEL_OK")
</pallas_src>

<mosaic_0001>
module attributes {stable_mosaic.version = 11 : i64} {
  func.func @_solo_bc_kernel(%arg0: i32, %arg1: memref<2x16xf32, #tpu.memory_space<vmem>>, %arg2: memref<16x256xbf16, #tpu.memory_space<vmem>>, %arg3: memref<1x256xf32, #tpu.memory_space<vmem>>, %arg4: memref<256x256xbf16, #tpu.memory_space<vmem>>, %arg5: memref<1x256xf32, #tpu.memory_space<vmem>>, %arg6: memref<256x256xbf16, #tpu.memory_space<vmem>>, %arg7: memref<1x256xf32, #tpu.memory_space<vmem>>, %arg8: memref<2x128xf32, #tpu.memory_space<vmem>>, %arg9: memref<2x128xf32, #tpu.memory_space<vmem>>) attributes {dimension_semantics = [#tpu.dimension_semantics<parallel>], iteration_bounds = array<i64: 1>, scalar_prefetch = 0 : i64, scratch_operands = 0 : i64, tpu.core_type = #tpu.core_type<tc>, window_params = [{transform_indices = @transform_0, window_bounds = array<i64: 2, 16>}, {pipeline_mode = #tpu.pipeline_mode<synchronous>, transform_indices = @transform_1, window_bounds = array<i64: 16, 256>}, {pipeline_mode = #tpu.pipeline_mode<synchronous>, transform_indices = @transform_2, window_bounds = array<i64: 1, 256>}, {pipeline_mode = #tpu.pipeline_mode<synchronous>, transform_indices = @transform_3, window_bounds = array<i64: 256, 256>}, {pipeline_mode = #tpu.pipeline_mode<synchronous>, transform_indices = @transform_4, window_bounds = array<i64: 1, 256>}, {pipeline_mode = #tpu.pipeline_mode<synchronous>, transform_indices = @transform_5, window_bounds = array<i64: 256, 256>}, {pipeline_mode = #tpu.pipeline_mode<synchronous>, transform_indices = @transform_6, window_bounds = array<i64: 1, 256>}, {transform_indices = @transform_7, window_bounds = array<i64: 2, 128>}, {transform_indices = @transform_8, window_bounds = array<i64: 2, 128>}]} {
    %c0 = arith.constant 0 : index
    %c0_0 = arith.constant 0 : index
    %0 = vector.load %arg1[%c0, %c0_0] : memref<2x16xf32, #tpu.memory_space<vmem>>, vector<2x16xf32>
    %1 = arith.truncf %0 : vector<2x16xf32> to vector<2x16xbf16>
    %c0_1 = arith.constant 0 : index
    %c0_2 = arith.constant 0 : index
    %2 = vector.load %arg2[%c0_1, %c0_2] : memref<16x256xbf16, #tpu.memory_space<vmem>>, vector<16x256xbf16>
    %cst = arith.constant dense<0.000000e+00> : vector<2x256xf32>
    %3 = tpu.matmul %1, %2, %cst {dimension_numbers = #tpu.dot_dimension_numbers<[1], [0], [0], [1], [0, 0, 1, 1], [], []>} : vector<2x16xbf16>, vector<16x256xbf16>, vector<2x256xf32> -> vector<2x256xf32>
    %c0_3 = arith.constant 0 : index
    %c0_4 = arith.constant 0 : index
    %4 = vector.load %arg3[%c0_3, %c0_4] : memref<1x256xf32, #tpu.memory_space<vmem>>, vector<1x256xf32>
    %5 = vector.broadcast %4 : vector<1x256xf32> to vector<2x256xf32>
    %6 = arith.addf %3, %5 : vector<2x256xf32>
    %cst_5 = arith.constant 0.000000e+00 : f32
    %7 = vector.broadcast %cst_5 : f32 to vector<2x256xf32>
    %8 = arith.maximumf %6, %7 : vector<2x256xf32>
    %9 = arith.truncf %8 : vector<2x256xf32> to vector<2x256xbf16>
    %c0_6 = arith.constant 0 : index
    %c0_7 = arith.constant 0 : index
    %10 = vector.load %arg4[%c0_6, %c0_7] : memref<256x256xbf16, #tpu.memory_space<vmem>>, vector<256x256xbf16>
    %cst_8 = arith.constant dense<0.000000e+00> : vector<2x256xf32>
    %11 = tpu.matmul %9, %10, %cst_8 {dimension_numbers = #tpu.dot_dimension_numbers<[1], [0], [0], [1], [0, 0, 1, 1], [], []>} : vector<2x256xbf16>, vector<256x256xbf16>, vector<2x256xf32> -> vector<2x256xf32>
    %c0_9 = arith.constant 0 : index
    %c0_10 = arith.constant 0 : index
    %12 = vector.load %arg5[%c0_9, %c0_10] : memref<1x256xf32, #tpu.memory_space<vmem>>, vector<1x256xf32>
    %13 = vector.broadcast %12 : vector<1x256xf32> to vector<2x256xf32>
    %14 = arith.addf %11, %13 : vector<2x256xf32>
    %cst_11 = arith.constant 0.000000e+00 : f32
    %15 = vector.broadcast %cst_11 : f32 to vector<2x256xf32>
    %16 = arith.maximumf %14, %15 : vector<2x256xf32>
    %17 = arith.truncf %16 : vector<2x256xf32> to vector<2x256xbf16>
    %c0_12 = arith.constant 0 : index
    %c0_13 = arith.constant 0 : index
    %18 = vector.load %arg6[%c0_12, %c0_13] : memref<256x256xbf16, #tpu.memory_space<vmem>>, vector<256x256xbf16>
    %cst_14 = arith.constant dense<0.000000e+00> : vector<2x256xf32>
    %19 = tpu.matmul %17, %18, %cst_14 {dimension_numbers = #tpu.dot_dimension_numbers<[1], [0], [0], [1], [0, 0, 1, 1], [], []>} : vector<2x256xbf16>, vector<256x256xbf16>, vector<2x256xf32> -> vector<2x256xf32>
    %c0_15 = arith.constant 0 : index
    %c0_16 = arith.constant 0 : index
    %20 = vector.load %arg7[%c0_15, %c0_16] : memref<1x256xf32, #tpu.memory_space<vmem>>, vector<1x256xf32>
    %21 = vector.broadcast %20 : vector<1x256xf32> to vector<2x256xf32>
    %22 = arith.addf %19, %21 : vector<2x256xf32>
    %23 = vector.extract_strided_slice %22 {offsets = [0, 0], sizes = [2, 128], strides = [1, 1]} : vector<2x256xf32> to vector<2x128xf32>
    %24 = vector.extract_strided_slice %22 {offsets = [0, 128], sizes = [2, 128], strides = [1, 1]} : vector<2x256xf32> to vector<2x128xf32>
    %25 = tpu.iota {dimensions = array<i32: 1>} : vector<2x128xi32>
    %26 = math.tanh %23 : vector<2x128xf32>
    %27 = math.tanh %24 : vector<2x128xf32>
    %cst_17 = arith.constant 1.000000e+00 : f32
    %28 = vector.broadcast %cst_17 : f32 to vector<2x128xf32>
    %29 = arith.addf %27, %28 : vector<2x128xf32>
    %cst_18 = arith.constant 3.500000e+00 : f32
    %30 = vector.broadcast %cst_18 : f32 to vector<2x128xf32>
    %31 = arith.mulf %30, %29 : vector<2x128xf32>
    %cst_19 = arith.constant -5.000000e+00 : f32
    %32 = vector.broadcast %cst_19 : f32 to vector<2x128xf32>
    %33 = arith.addf %32, %31 : vector<2x128xf32>
    %34 = math.exp %33 : vector<2x128xf32>
    %c12_i32 = arith.constant 12 : i32
    %35 = vector.broadcast %c12_i32 : i32 to vector<2x128xi32>
    %36 = arith.cmpi slt, %25, %35 : vector<2x128xi32>
    %c0_20 = arith.constant 0 : index
    %c0_21 = arith.constant 0 : index
    %37 = vector.load %arg8[%c0_20, %c0_21] : memref<2x128xf32, #tpu.memory_space<vmem>>, vector<2x128xf32>
    %cst_22 = arith.constant 0.000000e+00 : f32
    %38 = vector.broadcast %cst_22 : f32 to vector<2x128xf32>
    %39 = arith.select %36, %37, %38 : vector<2x128xi1>, vector<2x128xf32>
    %40 = arith.mulf %34, %39 : vector<2x128xf32>
    %41 = arith.addf %23, %40 : vector<2x128xf32>
    %42 = arith.mulf %39, %39 : vector<2x128xf32>
    %cst_23 = arith.constant -5.000000e-01 : f32
    %43 = vector.broadcast %cst_23 : f32 to vector<2x128xf32>
    %44 = arith.mulf %43, %42 : vector<2x128xf32>
    %45 = arith.subf %44, %33 : vector<2x128xf32>
    %cst_24 = arith.constant 0.918938517 : f32
    %46 = vector.broadcast %cst_24 : f32 to vector<2x128xf32>
    %47 = arith.subf %45, %46 : vector<2x128xf32>
    %c4_i32 = arith.constant 4 : i32
    %48 = vector.broadcast %c4_i32 : i32 to vector<2x128xi32>
    %49 = arith.cmpi slt, %25, %48 : vector<2x128xi32>
    %c8_i32 = arith.constant 8 : i32
    %50 = vector.broadcast %c8_i32 : i32 to vector<2x128xi32>
    %51 = arith.cmpi slt, %25, %50 : vector<2x128xi32>
    %c12_i32_25 = arith.constant 12 : i32
    %52 = vector.broadcast %c12_i32_25 : i32 to vector<2x128xi32>
    %53 = arith.cmpi slt, %25, %52 : vector<2x128xi32>
    %cst_26 = arith.constant 0.000000e+00 : f32
    %54 = vector.broadcast %cst_26 : f32 to vector<2x128xf32>
    %55 = arith.select %53, %47, %54 : vector<2x128xi1>, vector<2x128xf32>
    %56 = arith.select %51, %41, %55 : vector<2x128xi1>, vector<2x128xf32>
    %57 = arith.select %49, %26, %56 : vector<2x128xi1>, vector<2x128xf32>
    %c0_27 = arith.constant 0 : index
    %c0_28 = arith.constant 0 : index
    %58 = vector.load %arg9[%c0_27, %c0_28] : memref<2x128xf32, #tpu.memory_space<vmem>>, vector<2x128xf32>
    tpu.vector_store %arg9[%c0_27, %c0_28], %57 {strides = array<i32>} : memref<2x128xf32, #tpu.memory_space<vmem>>, vector<2x128xf32>,
    return
  }
  func.func @transform_0(%arg0: i32) -> (i32, i32) {
    %c0_i32 = arith.constant 0 : i32
    %c0_i32_0 = arith.constant 0 : i32
    return %arg0, %c0_i32 : i32, i32
  }
  func.func @transform_1(%arg0: i32) -> (i32, i32) {
    %c0_i32 = arith.constant 0 : i32
    %c0_i32_0 = arith.constant 0 : i32
    %c0_i32_1 = arith.constant 0 : i32
    return %c0_i32, %c0_i32_0 : i32, i32
  }
  func.func @transform_2(%arg0: i32) -> (i32, i32) {
    %c0_i32 = arith.constant 0 : i32
    %c0_i32_0 = arith.constant 0 : i32
    %c0_i32_1 = arith.constant 0 : i32
    return %c0_i32, %c0_i32_0 : i32, i32
  }
  func.func @transform_3(%arg0: i32) -> (i32, i32) {
    %c0_i32 = arith.constant 0 : i32
    %c0_i32_0 = arith.constant 0 : i32
    %c0_i32_1 = arith.constant 0 : i32
    return %c0_i32, %c0_i32_0 : i32, i32
  }
  func.func @transform_4(%arg0: i32) -> (i32, i32) {
    %c0_i32 = arith.constant 0 : i32
    %c0_i32_0 = arith.constant 0 : i32
    %c0_i32_1 = arith.constant 0 : i32
    return %c0_i32, %c0_i32_0 : i32, i32
  }
  func.func @transform_5(%arg0: i32) -> (i32, i32) {
    %c0_i32 = arith.constant 0 : i32
    %c0_i32_0 = arith.constant 0 : i32
    %c0_i32_1 = arith.constant 0 : i32
    return %c0_i32, %c0_i32_0 : i32, i32
  }
  func.func @transform_6(%arg0: i32) -> (i32, i32) {
    %c0_i32 = arith.constant 0 : i32
    %c0_i32_0 = arith.constant 0 : i32
    %c0_i32_1 = arith.constant 0 : i32
    return %c0_i32, %c0_i32_0 : i32, i32
  }
  func.func @transform_7(%arg0: i32) -> (i32, i32) {
    %c0_i32 = arith.constant 0 : i32
    %c0_i32_0 = arith.constant 0 : i32
    return %arg0, %c0_i32 : i32, i32
  }
  func.func @transform_8(%arg0: i32) -> (i32, i32) {
    %c0_i32 = arith.constant 0 : i32
    %c0_i32_0 = arith.constant 0 : i32
    return %arg0, %c0_i32 : i32, i32
  }
}

</mosaic_0001>

<llo_original>
// kernel: tpu_custom_call.1
$region0: #{tpu_custom_call.1}
  #allocation0 [shape = 'u32[]', space=smem, size = 0x4, offset = 0x4, fixed_abs, tag = 'smem constant byte address 0x4 - core index']
  #allocation1 [shape = 'u32[144,128]{1,0:T(1,128)}', space=vmem, size = 0x12000, scoped, tag = 'internal scratch']
  %s0 = inlined_call_operand.hbm [shape: f32[2,16], index: 0, kind: input, shape index: {}]
  %s1 = inlined_call_operand.hbm [shape: bf16[16,256], index: 1, kind: input, shape index: {}]
  %s2 = inlined_call_operand.vmem [shape: f32[1,256], index: 2, kind: input, shape index: {}]
  %s3 = inlined_call_operand.hbm [shape: bf16[256,256], index: 3, kind: input, shape index: {}]
  %s4 = inlined_call_operand.vmem [shape: f32[1,256], index: 4, kind: input, shape index: {}]
  %s5 = inlined_call_operand.hbm [shape: bf16[256,256], index: 5, kind: input, shape index: {}]
  %s6 = inlined_call_operand.vmem [shape: f32[1,256], index: 6, kind: input, shape index: {}]
  %s7 = inlined_call_operand.vmem [shape: f32[2,12], index: 7, kind: input, shape index: {}]
  %s8 = inlined_call_operand.hbm [shape: f32[2,128], index: 8, kind: output, shape index: {}]
  %s9 = sld [smem:[#allocation0]]
  $region58: #{tpu_custom_call.1} parent=0
    _
  %s11 = ssub.s32 1, %s9
  %s12 = scalar_select 0, %s11, %s9
  $region1: #{tpu_custom_call.1} parent=0
    #allocation2 [shape = 'u8[1024]{0}', space=vmem, size = 0x400, scoped, tag = 'input window, operand 0, single buffered']
    #allocation3 [shape = 's32[1]{0}', space=sflag, size = 0x4, scoped, tag = 'scoped memory for tpu_custom_call.1']
    #allocation4 [shape = 's32[1]{0}', space=sflag, size = 0x4, scoped, tag = 'scoped memory for tpu_custom_call.1']
    #allocation5 [shape = 'u8[8192]{0}', space=vmem, size = 0x2000, scoped, tag = 'input window, operand 1, single buffered']
    #allocation6 [shape = 's32[1]{0}', space=sflag, size = 0x4, scoped, tag = 'scoped memory for tpu_custom_call.1']
    #allocation7 [shape = 'u8[131072]{0}', space=vmem, size = 0x20000, scoped, tag = 'input window, operand 3, single buffered']
    #allocation8 [shape = 'u8[131072]{0}', space=vmem, size = 0x20000, scoped, tag = 'input window, operand 5, single buffered']
    #allocation9 [shape = 's32[1]{0}', space=sflag, size = 0x4, scoped, tag = 'scoped memory for tpu_custom_call.1']
    #allocation10 [shape = 'u8[1024]{0}', space=vmem, size = 0x400, scoped, tag = 'output window, operand 0, single buffered']
    %13 = vsyncpa [#allocation3], 0
    %14 = vsyncpa [#allocation6], 0
    %15 = vsyncpa [#allocation9], 0
    %16 = vsyncpa [#allocation4], 0
    // Predicated region
    $region2: #{tpu_custom_call.1} parent=1 // pred_check
      _
    $region3: #{tpu_custom_call.1} parent=1 // pred_check_branch
      %18 = sbr.rel (0) target = $region5
    $region4: #{tpu_custom_call.1} parent=1 // pred_region
      %s20 = ssub.s32 32, 32
      %21 = vsyncadd [#allocation3], %s20
      %s23 = sshll.u32 [#allocation2], 4
      %s24 = int_to_ptr.vmem [resolvable:$true] %s23
      %26 = dma.hbm_to_vmem [thread:$0]  %s0, 32, %s24, [#allocation3]
    $region5: #{tpu_custom_call.1} parent=1 // pred_fallthru
      _
    // Predicated region
    $region6: #{tpu_custom_call.1} parent=1 // pred_check
      _
    $region7: #{tpu_custom_call.1} parent=1 // pred_check_branch
      %28 = sbr.rel (0) target = $region9
    $region8: #{tpu_custom_call.1} parent=1 // pred_region
      %s30 = ssub.s32 256, 256
      %31 = vsyncadd [#allocation6], %s30
      %s32 = sshll.u32 [#allocation5], 4
      %s33 = int_to_ptr.vmem [resolvable:$true] %s32
      %38 = dma.hbm_to_vmem [thread:$0]  %s1, 256, %s33, [#allocation6], 128, 128, 8
    $region9: #{tpu_custom_call.1} parent=1 // pred_fallthru
      _
    // Predicated region
    $region10: #{tpu_custom_call.1} parent=1 // pred_check
      _
    $region11: #{tpu_custom_call.1} parent=1 // pred_check_branch
      %40 = sbr.rel (0) target = $region13
    $region12: #{tpu_custom_call.1} parent=1 // pred_region
      _
    $region13: #{tpu_custom_call.1} parent=1 // pred_fallthru
      _
    // Predicated region
    $region14: #{tpu_custom_call.1} parent=1 // pred_check
      _
    $region15: #{tpu_custom_call.1} parent=1 // pred_check_branch
      %42 = sbr.rel (0) target = $region17
    $region16: #{tpu_custom_call.1} parent=1 // pred_region
      %s44 = ssub.s32 4096, 4096
      %45 = vsyncadd [#allocation6], %s44
      %s46 = sshll.u32 [#allocation7], 4
      %s47 = int_to_ptr.vmem [resolvable:$true] %s46
      %52 = dma.hbm_to_vmem [thread:$0]  %s3, 4096, %s47, [#allocation6], 128, 128, 8
    $region17: #{tpu_custom_call.1} parent=1 // pred_fallthru
      _
    // Predicated region
    $region18: #{tpu_custom_call.1} parent=1 // pred_check
      _
    $region19: #{tpu_custom_call.1} parent=1 // pred_check_branch
      %54 = sbr.rel (0) target = $region21
    $region20: #{tpu_custom_call.1} parent=1 // pred_region
      _
    $region21: #{tpu_custom_call.1} parent=1 // pred_fallthru
      _
    // Predicated region
    $region22: #{tpu_custom_call.1} parent=1 // pred_check
      _
    $region23: #{tpu_custom_call.1} parent=1 // pred_check_branch
      %56 = sbr.rel (0) target = $region25
    $region24: #{tpu_custom_call.1} parent=1 // pred_region
      %s58 = ssub.s32 4096, 4096
      %59 = vsyncadd [#allocation9], %s58
      %s60 = sshll.u32 [#allocation8], 4
      %s61 = int_to_ptr.vmem [resolvable:$true] %s60
      %66 = dma.hbm_to_vmem [thread:$0]  %s5, 4096, %s61, [#allocation9], 128, 128, 8
    $region25: #{tpu_custom_call.1} parent=1 // pred_fallthru
      _
    // Predicated region
    $region26: #{tpu_custom_call.1} parent=1 // pred_check
      _
    $region27: #{tpu_custom_call.1} parent=1 // pred_check_branch
      %68 = sbr.rel (0) target = $region29
    $region28: #{tpu_custom_call.1} parent=1 // pred_region
      _
    $region29: #{tpu_custom_call.1} parent=1 // pred_fallthru
      _
    // Predicated region
    $region30: #{tpu_custom_call.1} parent=1 // pred_check
      _
    $region31: #{tpu_custom_call.1} parent=1 // pred_check_branch
      %70 = sbr.rel (0) target = $region33
    $region32: #{tpu_custom_call.1} parent=1 // pred_region
      _
    $region33: #{tpu_custom_call.1} parent=1 // pred_fallthru
      _
    // Predicated region
    $region34: #{tpu_custom_call.1} parent=1 // pred_check
      _
    $region35: #{tpu_custom_call.1} parent=1 // pred_check_branch
      %72 = sbr.rel (0) target = $region37
    $region36: #{tpu_custom_call.1} parent=1 // pred_region
      %73 = dma.done [#allocation3], 32
    $region37: #{tpu_custom_call.1} parent=1 // pred_fallthru
      _
    // Predicated region
    $region38: #{tpu_custom_call.1} parent=1 // pred_check
      _
    $region39: #{tpu_custom_call.1} parent=1 // pred_check_branch
      %75 = sbr.rel (0) target = $region41
    $region40: #{tpu_custom_call.1} parent=1 // pred_region
      %76 = dma.done [#allocation6], 256
    $region41: #{tpu_custom_call.1} parent=1 // pred_fallthru
      _
    // Predicated region
    $region42: #{tpu_custom_call.1} parent=1 // pred_check
      _
    $region43: #{tpu_custom_call.1} parent=1 // pred_check_branch
      %78 = sbr.rel (0) target = $region45
    $region44: #{tpu_custom_call.1} parent=1 // pred_region
      %79 = dma.done [#allocation6], 4096
    $region45: #{tpu_custom_call.1} parent=1 // pred_fallthru
      _
    // Predicated region
    $region46: #{tpu_custom_call.1} parent=1 // pred_check
      _
    $region47: #{tpu_custom_call.1} parent=1 // pred_check_branch
      %81 = sbr.rel (0) target = $region49
    $region48: #{tpu_custom_call.1} parent=1 // pred_region
      %82 = dma.done [#allocation9], 4096
    $region49: #{tpu_custom_call.1} parent=1 // pred_fallthru
      _
    %v84 = vld [vmem:[#allocation2] sm:$0x3]
    %v85 = vpack.c.bf16 %v84, %v84
    %v86 = vld [vmem:[#allocation5] sm:$0xff]
    %v87 = vld [vmem:[#allocation5 + $0x8] sm:$0xff]
    %v88 = vld [vmem:[%s2] sm:$0x3]
    %v90 = vlaneseq
    %v91 = vshrl.u32 %v90, 7
    %v92 = vsub.s32 0, %v91
    %v93 = vrot.slane %v88, %v92
    %v94 = vlaneseq
    %v95 = vshrl.u32 %v94, 7
    %v96 = vsub.s32 1, %v95
    %v97 = vrot.slane %v88, %v96
    %v102 = vunpack.c.l.b16 %v86
    %v103 = vunpack.c.h.b16 %v86
    %v104 = vunpack.c.l.b16 %v87
    %v105 = vunpack.c.h.b16 %v87
    %v106 = vpack.c.b16 %v104, %v102
    %v107 = vpack.c.b16 %v105, %v103
    %vm110 = vcmask 130048
    %v112 = vsel %vm110, %v85, 0
    %114 = vmatprep.subr.bf16.mxu0 0
    %115 = vmatpush1.bf16.msra.mxu0 0
    %116 = vmatprep.subr.bf16.mxu0 0
    %117 = vmatpush1.bf16.msra.mxu0 0
    %118 = vmatprep.subr.bf16.mxu0 0
    %119 = vmatpush1.bf16.msra.mxu0 0
    %120 = vmatprep.subr.bf16.mxu0 0
    %121 = vmatpush1.bf16.msra.mxu0 0
    %122 = vmatprep.subr.bf16.mxu0 0
    %123 = vmatpush1.bf16.msra.mxu0 0
    %124 = vmatprep.subr.bf16.mxu0 0
    %125 = vmatpush1.bf16.msra.mxu0 0
    %126 = vmatprep.subr.bf16.mxu0 0
    %127 = vmatpush1.bf16.msra.mxu0 0
    %128 = vmatprep.subr.bf16.mxu0 %v107
    %129 = vmatpush1.bf16.msra.mxu0 %v106
    %130 = vmatprep.subr.bf16.mxu0 0
    %131 = vmatpush2.bf16.msra.mxu0 0
    %132 = vmatprep.subr.bf16.mxu0 0
    %133 = vmatpush2.bf16.msra.mxu0 0
    %134 = vmatprep.subr.bf16.mxu0 0
    %135 = vmatpush2.bf16.msra.mxu0 0
    %136 = vmatprep.subr.bf16.mxu0 0
    %137 = vmatpush2.bf16.msra.mxu0 0
    %138 = vmatprep.subr.bf16.mxu0 0
    %139 = vmatpush2.bf16.msra.mxu0 0
    %140 = vmatprep.subr.bf16.mxu0 0
    %141 = vmatpush2.bf16.msra.mxu0 0
    %142 = vmatprep.subr.bf16.mxu0 0
    %143 = vmatpush2.bf16.msra.mxu0 0
    %144 = vmatprep.subr.bf16.mxu0 0
    %145 = vmatpush2.bf16.msra.mxu0 0
    %146 = vmatprep.mubr.bf16.mxu0 0
    %147 = vmatmul.mubr.bf16.gmra.mxu0 %v112
    %v148 = vpop.f32.mrf.mxu0
    %v149 = vadd.f32 %v93, %v148
    %v150 = vpop.f32.mrf.mxu0
    %v151 = vadd.f32 %v97, %v150
    %v152 = vpop.f32.mrf.mxu0
    %v153 = vpop.f32.mrf.mxu0
    %154 = vdwg.mxu0
    %v155 = vmax.f32 %v149, 0.0
    %v156 = vmax.f32 %v151, 0.0
    %v157 = vpack.c.bf16 %v155, %v155
    %v158 = vpack.c.bf16 %v156, %v156
    %v159 = vld [vmem:[#allocation7] sm:$0xff]
    %v160 = vld [vmem:[#allocation7 + $0x8] sm:$0xff]
    %v161 = vld [vmem:[#allocation7 + $0x10] sm:$0xff]
    %v162 = vld [vmem:[#allocation7 + $0x18] sm:$0xff]
    %v163 = vld [vmem:[#allocation7 + $0x20] sm:$0xff]
    %v164 = vld [vmem:[#allocation7 + $0x28] sm:$0xff]
    %v165 = vld [vmem:[#allocation7 + $0x30] sm:$0xff]
    %v166 = vld [vmem:[#allocation7 + $0x38] sm:$0xff]
    %v167 = vld [vmem:[#allocation7 + $0x40] sm:$0xff]
    %v168 = vld [vmem:[#allocation7 + $0x48] sm:$0xff]
    %v169 = vld [vmem:[#allocation7 + $0x50] sm:$0xff]
    %v170 = vld [vmem:[#allocation7 + $0x58] sm:$0xff]
    %v171 = vld [vmem:[#allocation7 + $0x60] sm:$0xff]
    %v172 = vld [vmem:[#allocation7 + $0x68] sm:$0xff]
    %v173 = vld [vmem:[#allocation7 + $0x70] sm:$0xff]
    %v174 = vld [vmem:[#allocation7 + $0x78] sm:$0xff]
    %v175 = vld [vmem:[#allocation7 + $0x80] sm:$0xff]
    %v176 = vld [vmem:[#allocation7 + $0x88] sm:$0xff]
    %v177 = vld [vmem:[#allocation7 + $0x90] sm:$0xff]
    %v178 = vld [vmem:[#allocation7 + $0x98] sm:$0xff]
    %v179 = vld [vmem:[#allocation7 + $0xa0] sm:$0xff]
    %v180 = vld [vmem:[#allocation7 + $0xa8] sm:$0xff]
    %v181 = vld [vmem:[#allocation7 + $0xb0] sm:$0xff]
    %v182 = vld [vmem:[#allocation7 + $0xb8] sm:$0xff]
    %v183 = vld [vmem:[#allocation7 + $0xc0] sm:$0xff]
    %v184 = vld [vmem:[#allocation7 + $0xc8] sm:$0xff]
    %v185 = vld [vmem:[#allocation7 + $0xd0] sm:$0xff]
    %v186 = vld [vmem:[#allocation7 + $0xd8] sm:$0xff]
    %v187 = vld [vmem:[#allocation7 + $0xe0] sm:$0xff]
    %v188 = vld [vmem:[#allocation7 + $0xe8] sm:$0xff]
    %v189 = vld [vmem:[#allocation7 + $0xf0] sm:$0xff]
    %v190 = vld [vmem:[#allocation7 + $0xf8] sm:$0xff]
    %v191 = vld [vmem:[%s4] sm:$0x3]
    %v193 = vlaneseq
    %v194 = vshrl.u32 %v193, 7
    %v195 = vsub.s32 0, %v194
    %v196 = vrot.slane %v191, %v195
    %v197 = vlaneseq
    %v198 = vshrl.u32 %v197, 7
    %v199 = vsub.s32 1, %v198
    %v200 = vrot.slane %v191, %v199
    %v235 = vunpack.c.l.b16 %v159
    %v236 = vunpack.c.h.b16 %v159
    %v237 = vunpack.c.l.b16 %v160
    %v238 = vunpack.c.h.b16 %v160
    %v239 = vunpack.c.l.b16 %v161
    %v240 = vunpack.c.h.b16 %v161
    %v241 = vunpack.c.l.b16 %v162
    %v242 = vunpack.c.h.b16 %v162
    %v243 = vunpack.c.l.b16 %v163
    %v244 = vunpack.c.h.b16 %v163
    %v245 = vunpack.c.l.b16 %v164
    %v246 = vunpack.c.h.b16 %v164
    %v247 = vunpack.c.l.b16 %v165
    %v248 = vunpack.c.h.b16 %v165
    %v249 = vunpack.c.l.b16 %v166
    %v250 = vunpack.c.h.b16 %v166
    %v251 = vunpack.c.l.b16 %v167
    %v252 = vunpack.c.h.b16 %v167
    %v253 = vunpack.c.l.b16 %v168
    %v254 = vunpack.c.h.b16 %v168
    %v255 = vunpack.c.l.b16 %v169
    %v256 = vunpack.c.h.b16 %v169
    %v257 = vunpack.c.l.b16 %v170
    %v258 = vunpack.c.h.b16 %v170
    %v259 = vunpack.c.l.b16 %v171
    %v260 = vunpack.c.h.b16 %v171
    %v261 = vunpack.c.l.b16 %v172
    %v262 = vunpack.c.h.b16 %v172
    %v263 = vunpack.c.l.b16 %v173
    %v264 = vunpack.c.h.b16 %v173
    %v265 = vunpack.c.l.b16 %v174
    %v266 = vunpack.c.h.b16 %v174
    %v267 = vunpack.c.l.b16 %v175
    %v268 = vunpack.c.h.b16 %v175
    %v269 = vunpack.c.l.b16 %v176
    %v270 = vunpack.c.h.b16 %v176
    %v271 = vunpack.c.l.b16 %v177
    %v272 = vunpack.c.h.b16 %v177
    %v273 = vunpack.c.l.b16 %v178
    %v274 = vunpack.c.h.b16 %v178
    %v275 = vunpack.c.l.b16 %v179
    %v276 = vunpack.c.h.b16 %v179
    %v277 = vunpack.c.l.b16 %v180
    %v278 = vunpack.c.h.b16 %v180
    %v279 = vunpack.c.l.b16 %v181
    %v280 = vunpack.c.h.b16 %v181
    %v281 = vunpack.c.l.b16 %v182
    %v282 = vunpack.c.h.b16 %v182
    %v283 = vunpack.c.l.b16 %v183
    %v284 = vunpack.c.h.b16 %v183
    %v285 = vunpack.c.l.b16 %v184
    %v286 = vunpack.c.h.b16 %v184
    %v287 = vunpack.c.l.b16 %v185
    %v288 = vunpack.c.h.b16 %v185
    %v289 = vunpack.c.l.b16 %v186
    %v290 = vunpack.c.h.b16 %v186
    %v291 = vunpack.c.l.b16 %v187
    %v292 = vunpack.c.h.b16 %v187
    %v293 = vunpack.c.l.b16 %v188
    %v294 = vunpack.c.h.b16 %v188
    %v295 = vunpack.c.l.b16 %v189
    %v296 = vunpack.c.h.b16 %v189
    %v297 = vunpack.c.l.b16 %v190
    %v298 = vunpack.c.h.b16 %v190
    %v299 = vpack.c.b16 %v237, %v235
    %v300 = vpack.c.b16 %v238, %v236
    %v301 = vpack.c.b16 %v241, %v239
    %v302 = vpack.c.b16 %v242, %v240
    %v303 = vpack.c.b16 %v245, %v243
    %v304 = vpack.c.b16 %v246, %v244
    %v305 = vpack.c.b16 %v249, %v247
    %v306 = vpack.c.b16 %v250, %v248
    %v307 = vpack.c.b16 %v253, %v251
    %v308 = vpack.c.b16 %v254, %v252
    %v309 = vpack.c.b16 %v257, %v255
    %v310 = vpack.c.b16 %v258, %v256
    %v311 = vpack.c.b16 %v261, %v259
    %v312 = vpack.c.b16 %v262, %v260
    %v313 = vpack.c.b16 %v265, %v263
    %v314 = vpack.c.b16 %v266, %v264
    %v315 = vpack.c.b16 %v269, %v267
    %v316 = vpack.c.b16 %v270, %v268
    %v317 = vpack.c.b16 %v273, %v271
    %v318 = vpack.c.b16 %v274, %v272
    %v319 = vpack.c.b16 %v277, %v275
    %v320 = vpack.c.b16 %v278, %v276
    %v321 = vpack.c.b16 %v281, %v279
    %v322 = vpack.c.b16 %v282, %v280
    %v323 = vpack.c.b16 %v285, %v283
    %v324 = vpack.c.b16 %v286, %v284
    %v325 = vpack.c.b16 %v289, %v287
    %v326 = vpack.c.b16 %v290, %v288
    %v327 = vpack.c.b16 %v293, %v291
    %v328 = vpack.c.b16 %v294, %v292
    %v329 = vpack.c.b16 %v297, %v295
    %v330 = vpack.c.b16 %v298, %v296
    %363 = vmatprep.subr.bf16.mxu0 %v314
    %364 = vmatpush1.bf16.msra.mxu0 %v313
    %365 = vmatprep.subr.bf16.mxu0 %v312
    %366 = vmatpush1.bf16.msra.mxu0 %v311
    %367 = vmatprep.subr.bf16.mxu0 %v310
    %368 = vmatpush1.bf16.msra.mxu0 %v309
    %369 = vmatprep.subr.bf16.mxu0 %v308
    %370 = vmatpush1.bf16.msra.mxu0 %v307
    %371 = vmatprep.subr.bf16.mxu0 %v306
    %372 = vmatpush1.bf16.msra.mxu0 %v305
    %373 = vmatprep.subr.bf16.mxu0 %v304
    %374 = vmatpush1.bf16.msra.mxu0 %v303
    %375 = vmatprep.subr.bf16.mxu0 %v302
    %376 = vmatpush1.bf16.msra.mxu0 %v301
    %377 = vmatprep.subr.bf16.mxu0 %v300
    %378 = vmatpush1.bf16.msra.mxu0 %v299
    %379 = vmatprep.subr.bf16.mxu0 %v330
    %380 = vmatpush2.bf16.msra.mxu0 %v329
    %381 = vmatprep.subr.bf16.mxu0 %v328
    %382 = vmatpush2.bf16.msra.mxu0 %v327
    %383 = vmatprep.subr.bf16.mxu0 %v326
    %384 = vmatpush2.bf16.msra.mxu0 %v325
    %385 = vmatprep.subr.bf16.mxu0 %v324
    %386 = vmatpush2.bf16.msra.mxu0 %v323
    %387 = vmatprep.subr.bf16.mxu0 %v322
    %388 = vmatpush2.bf16.msra.mxu0 %v321
    %389 = vmatprep.subr.bf16.mxu0 %v320
    %390 = vmatpush2.bf16.msra.mxu0 %v319
    %391 = vmatprep.subr.bf16.mxu0 %v318
    %392 = vmatpush2.bf16.msra.mxu0 %v317
    %393 = vmatprep.subr.bf16.mxu0 %v316
    %394 = vmatpush2.bf16.msra.mxu0 %v315
    %395 = vmatprep.mubr.bf16.mxu0 %v158
    %396 = vmatmul.mubr.bf16.gmra.mxu0 %v157
    %v397 = vpop.f32.mrf.mxu0
    %v398 = vadd.f32 %v196, %v397
    %v399 = vpop.f32.mrf.mxu0
    %v400 = vadd.f32 %v200, %v399
    %v401 = vpop.f32.mrf.mxu0
    %v402 = vpop.f32.mrf.mxu0
    %403 = vdwg.mxu0
    %v404 = vmax.f32 %v398, 0.0
    %v405 = vmax.f32 %v400, 0.0
    %v406 = vpack.c.bf16 %v404, %v404
    %v407 = vpack.c.bf16 %v405, %v405
    %v408 = vld [vmem:[#allocation8] sm:$0xff]
    %v409 = vld [vmem:[#allocation8 + $0x8] sm:$0xff]
    %v410 = vld [vmem:[#allocation8 + $0x10] sm:$0xff]
    %v411 = vld [vmem:[#allocation8 + $0x18] sm:$0xff]
    %v412 = vld [vmem:[#allocation8 + $0x20] sm:$0xff]
    %v413 = vld [vmem:[#allocation8 + $0x28] sm:$0xff]
    %v414 = vld [vmem:[#allocation8 + $0x30] sm:$0xff]
    %v415 = vld [vmem:[#allocation8 + $0x38] sm:$0xff]
    %v416 = vld [vmem:[#allocation8 + $0x40] sm:$0xff]
    %v417 = vld [vmem:[#allocation8 + $0x48] sm:$0xff]
    %v418 = vld [vmem:[#allocation8 + $0x50] sm:$0xff]
    %v419 = vld [vmem:[#allocation8 + $0x58] sm:$0xff]
    %v420 = vld [vmem:[#allocation8 + $0x60] sm:$0xff]
    %v421 = vld [vmem:[#allocation8 + $0x68] sm:$0xff]
    %v422 = vld [vmem:[#allocation8 + $0x70] sm:$0xff]
    %v423 = vld [vmem:[#allocation8 + $0x78] sm:$0xff]
    %v424 = vld [vmem:[#allocation8 + $0x80] sm:$0xff]
    %v425 = vld [vmem:[#allocation8 + $0x88] sm:$0xff]
    %v426 = vld [vmem:[#allocation8 + $0x90] sm:$0xff]
    %v427 = vld [vmem:[#allocation8 + $0x98] sm:$0xff]
    %v428 = vld [vmem:[#allocation8 + $0xa0] sm:$0xff]
    %v429 = vld [vmem:[#allocation8 + $0xa8] sm:$0xff]
    %v430 = vld [vmem:[#allocation8 + $0xb0] sm:$0xff]
    %v431 = vld [vmem:[#allocation8 + $0xb8] sm:$0xff]
    %v432 = vld [vmem:[#allocation8 + $0xc0] sm:$0xff]
    %v433 = vld [vmem:[#allocation8 + $0xc8] sm:$0xff]
    %v434 = vld [vmem:[#allocation8 + $0xd0] sm:$0xff]
    %v435 = vld [vmem:[#allocation8 + $0xd8] sm:$0xff]
    %v436 = vld [vmem:[#allocation8 + $0xe0] sm:$0xff]
    %v437 = vld [vmem:[#allocation8 + $0xe8] sm:$0xff]
    %v438 = vld [vmem:[#allocation8 + $0xf0] sm:$0xff]
    %v439 = vld [vmem:[#allocation8 + $0xf8] sm:$0xff]
    %v440 = vld [vmem:[%s6] sm:$0x3]
    %v442 = vlaneseq
    %v443 = vshrl.u32 %v442, 7
    %v444 = vsub.s32 0, %v443
    %v445 = vrot.slane %v440, %v444
    %v446 = vlaneseq
    %v447 = vshrl.u32 %v446, 7
    %v448 = vsub.s32 1, %v447
    %v449 = vrot.slane %v440, %v448
    %v484 = vunpack.c.l.b16 %v408
    %v485 = vunpack.c.h.b16 %v408
    %v486 = vunpack.c.l.b16 %v409
    %v487 = vunpack.c.h.b16 %v409
    %v488 = vunpack.c.l.b16 %v410
    %v489 = vunpack.c.h.b16 %v410
    %v490 = vunpack.c.l.b16 %v411
    %v491 = vunpack.c.h.b16 %v411
    %v492 = vunpack.c.l.b16 %v412
    %v493 = vunpack.c.h.b16 %v412
    %v494 = vunpack.c.l.b16 %v413
    %v495 = vunpack.c.h.b16 %v413
    %v496 = vunpack.c.l.b16 %v414
    %v497 = vunpack.c.h.b16 %v414
    %v498 = vunpack.c.l.b16 %v415
    %v499 = vunpack.c.h.b16 %v415
    %v500 = vunpack.c.l.b16 %v416
    %v501 = vunpack.c.h.b16 %v416
    %v502 = vunpack.c.l.b16 %v417
    %v503 = vunpack.c.h.b16 %v417
    %v504 = vunpack.c.l.b16 %v418
    %v505 = vunpack.c.h.b16 %v418
    %v506 = vunpack.c.l.b16 %v419
    %v507 = vunpack.c.h.b16 %v419
    %v508 = vunpack.c.l.b16 %v420
    %v509 = vunpack.c.h.b16 %v420
    %v510 = vunpack.c.l.b16 %v421
    %v511 = vunpack.c.h.b16 %v421
    %v512 = vunpack.c.l.b16 %v422
    %v513 = vunpack.c.h.b16 %v422
    %v514 = vunpack.c.l.b16 %v423
    %v515 = vunpack.c.h.b16 %v423
    %v516 = vunpack.c.l.b16 %v424
    %v517 = vunpack.c.h.b16 %v424
    %v518 = vunpack.c.l.b16 %v425
    %v519 = vunpack.c.h.b16 %v425
    %v520 = vunpack.c.l.b16 %v426
    %v521 = vunpack.c.h.b16 %v426
    %v522 = vunpack.c.l.b16 %v427
    %v523 = vunpack.c.h.b16 %v427
    %v524 = vunpack.c.l.b16 %v428
    %v525 = vunpack.c.h.b16 %v428
    %v526 = vunpack.c.l.b16 %v429
    %v527 = vunpack.c.h.b16 %v429
    %v528 = vunpack.c.l.b16 %v430
    %v529 = vunpack.c.h.b16 %v430
    %v530 = vunpack.c.l.b16 %v431
    %v531 = vunpack.c.h.b16 %v431
    %v532 = vunpack.c.l.b16 %v432
    %v533 = vunpack.c.h.b16 %v432
    %v534 = vunpack.c.l.b16 %v433
    %v535 = vunpack.c.h.b16 %v433
    %v536 = vunpack.c.l.b16 %v434
    %v537 = vunpack.c.h.b16 %v434
    %v538 = vunpack.c.l.b16 %v435
    %v539 = vunpack.c.h.b16 %v435
    %v540 = vunpack.c.l.b16 %v436
    %v541 = vunpack.c.h.b16 %v436
    %v542 = vunpack.c.l.b16 %v437
    %v543 = vunpack.c.h.b16 %v437
    %v544 = vunpack.c.l.b16 %v438
    %v545 = vunpack.c.h.b16 %v438
    %v546 = vunpack.c.l.b16 %v439
    %v547 = vunpack.c.h.b16 %v439
    %v548 = vpack.c.b16 %v486, %v484
    %v549 = vpack.c.b16 %v487, %v485
    %v550 = vpack.c.b16 %v490, %v488
    %v551 = vpack.c.b16 %v491, %v489
    %v552 = vpack.c.b16 %v494, %v492
    %v553 = vpack.c.b16 %v495, %v493
    %v554 = vpack.c.b16 %v498, %v496
    %v555 = vpack.c.b16 %v499, %v497
    %v556 = vpack.c.b16 %v502, %v500
    %v557 = vpack.c.b16 %v503, %v501
    %v558 = vpack.c.b16 %v506, %v504
    %v559 = vpack.c.b16 %v507, %v505
    %v560 = vpack.c.b16 %v510, %v508
    %v561 = vpack.c.b16 %v511, %v509
    %v562 = vpack.c.b16 %v514, %v512
    %v563 = vpack.c.b16 %v515, %v513
    %v564 = vpack.c.b16 %v518, %v516
    %v565 = vpack.c.b16 %v519, %v517
    %v566 = vpack.c.b16 %v522, %v520
    %v567 = vpack.c.b16 %v523, %v521
    %v568 = vpack.c.b16 %v526, %v524
    %v569 = vpack.c.b16 %v527, %v525
    %v570 = vpack.c.b16 %v530, %v528
    %v571 = vpack.c.b16 %v531, %v529
    %v572 = vpack.c.b16 %v534, %v532
    %v573 = vpack.c.b16 %v535, %v533
    %v574 = vpack.c.b16 %v538, %v536
    %v575 = vpack.c.b16 %v539, %v537
    %v576 = vpack.c.b16 %v542, %v540
    %v577 = vpack.c.b16 %v543, %v541
    %v578 = vpack.c.b16 %v546, %v544
    %v579 = vpack.c.b16 %v547, %v545
    %612 = vmatprep.subr.bf16.mxu0 %v563
    %613 = vmatpush1.bf16.msra.mxu0 %v562
    %614 = vmatprep.subr.bf16.mxu0 %v561
    %615 = vmatpush1.bf16.msra.mxu0 %v560
    %616 = vmatprep.subr.bf16.mxu0 %v559
    %617 = vmatpush1.bf16.msra.mxu0 %v558
    %618 = vmatprep.subr.bf16.mxu0 %v557
    %619 = vmatpush1.bf16.msra.mxu0 %v556
    %620 = vmatprep.subr.bf16.mxu0 %v555
    %621 = vmatpush1.bf16.msra.mxu0 %v554
    %622 = vmatprep.subr.bf16.mxu0 %v553
    %623 = vmatpush1.bf16.msra.mxu0 %v552
    %624 = vmatprep.subr.bf16.mxu0 %v551
    %625 = vmatpush1.bf16.msra.mxu0 %v550
    %626 = vmatprep.subr.bf16.mxu0 %v549
    %627 = vmatpush1.bf16.msra.mxu0 %v548
    %628 = vmatprep.subr.bf16.mxu0 %v579
    %629 = vmatpush2.bf16.msra.mxu0 %v578
    %630 = vmatprep.subr.bf16.mxu0 %v577
    %631 = vmatpush2.bf16.msra.mxu0 %v576
    %632 = vmatprep.subr.bf16.mxu0 %v575
    %633 = vmatpush2.bf16.msra.mxu0 %v574
    %634 = vmatprep.subr.bf16.mxu0 %v573
    %635 = vmatpush2.bf16.msra.mxu0 %v572
    %636 = vmatprep.subr.bf16.mxu0 %v571
    %637 = vmatpush2.bf16.msra.mxu0 %v570
    %638 = vmatprep.subr.bf16.mxu0 %v569
    %639 = vmatpush2.bf16.msra.mxu0 %v568
    %640 = vmatprep.subr.bf16.mxu0 %v567
    %641 = vmatpush2.bf16.msra.mxu0 %v566
    %642 = vmatprep.subr.bf16.mxu0 %v565
    %643 = vmatpush2.bf16.msra.mxu0 %v564
    %644 = vmatprep.mubr.bf16.mxu0 %v407
    %645 = vmatmul.mubr.bf16.gmra.mxu0 %v406
    %v646 = vpop.f32.mrf.mxu0
    %v647 = vadd.f32 %v445, %v646
    %v648 = vpop.f32.mrf.mxu0
    %v649 = vadd.f32 %v449, %v648
    %v650 = vpop.f32.mrf.mxu0
    %v651 = vpop.f32.mrf.mxu0
    %652 = vdwg.mxu0
    %v653 = vlaneseq
    %v654 = vand.u32 %v653, 127
    %v655 = vtanh.pop %v647
    %v656 = vtanh.pop %v649
    %v657 = vadd.f32 %v656, 1.0
    %v658 = vmul.f32 %v657, 3.5
    %v659 = vadd.f32 %v658, -5.0
    %v660 = vmul.f32 %v659, 1.442695
    %v661 = vpow.pop %v660
    %vm662 = vcmp.lt.s32.totalorder %v654, 12
    %v663 = vld [vmem:[%s7] sm:$0x3]
    %v664 = vsel %vm662, %v663, 0.0
    %v665 = vmul.f32 %v661, %v664
    %v666 = vadd.f32 %v647, %v665
    %v667 = vmul.f32 %v664, %v664
    %v668 = vmul.f32 %v667, -0.5
    %v669 = vsub.f32 %v668, %v659
    %v670 = vsub.f32 %v669, 0.9189385
    %vm671 = vcmp.lt.s32.totalorder %v654, 4
    %vm672 = vcmp.lt.s32.totalorder %v654, 8
    %v673 = vsel %vm662, %v670, 0.0
    %v674 = vsel %vm672, %v666, %v673
    %v675 = vsel %vm671, %v655, %v674
    %676 = vst [vmem:[#allocation10] sm:$0x3] %v675
    // Predicated region
    $region50: #{tpu_custom_call.1} parent=1 // pred_check
      _
    $region51: #{tpu_custom_call.1} parent=1 // pred_check_branch
      %678 = sbr.rel (0) target = $region53
    $region52: #{tpu_custom_call.1} parent=1 // pred_region
      %s680 = ssub.s32 32, 32
      %681 = vsyncadd [#allocation4], %s680
      %s683 = sshll.u32 [#allocation10], 4
      %s684 = int_to_ptr.vmem [resolvable:$true] %s683
      %686 = dma.vmem_to_hbm [thread:$0]  %s684, 32, %s8, [#allocation4]
    $region53: #{tpu_custom_call.1} parent=1 // pred_fallthru
      _
    // Predicated region
    $region54: #{tpu_custom_call.1} parent=1 // pred_check
      _
    $region55: #{tpu_custom_call.1} parent=1 // pred_check_branch
      %688 = sbr.rel (0) target = $region57
    $region56: #{tpu_custom_call.1} parent=1 // pred_region
      %689 = dma.done [#allocation4], 32
    $region57: #{tpu_custom_call.1} parent=1 // pred_fallthru
      _
    %690 = vsyncpa [#allocation3], 1
    %691 = vsyncpa [#allocation6], 1
    %692 = vsyncpa [#allocation9], 1
    %693 = vsyncpa [#allocation4], 1

</llo_original>
